<compile_context>
chip_gen: v7x
topology: tpu7x:2x2x1
jax: 0.10.0
libtpu: 0.0.40
codegen_flags: <defaults>
</compile_context>

<pallas_src>
import functools

import jax
import jax.numpy as jnp
from jax.experimental import pallas as pl
from jax.experimental.pallas import tpu as pltpu

LANE = 128      # lane width (batch axis inside the kernel)
HID_PAD = 128   # hidden features (10) padded on the sublane axis for the MXU
OUT_PAD = 8     # output features (5) padded to 8 sublanes

# Row offsets inside the packed (264, 128) parameter buffer.
#   rows   0:128 ("misc"): col0 = W1[0,:], col1 = W1[1,:], col2 = b1, col3 = b2, col4 = b3
#   rows 128:256          : W2^T (10x10) zero-padded to (128,128)
#   rows 256:264          : W3^T (5x10)  zero-padded to (8,128)
_MISC_ROW = 0
_W2T_ROW = 128
_W3T_ROW = 256
_PACK_ROWS = 264


def _round_up(x, m):
    return ((x + m - 1) // m) * m


def mlp_kernel(x_ref, p_ref, o_ref):
    f32 = jnp.float32
    # Batch lives on the 128-lane axis; features live on sublanes.
    x0 = x_ref[0:1, :].astype(f32)                                   # (1, tb)
    x1 = x_ref[1:2, :].astype(f32)                                   # (1, tb)

    w1c0 = p_ref[_MISC_ROW:_MISC_ROW + HID_PAD, 0:1].astype(f32)     # (128, 1)
    w1c1 = p_ref[_MISC_ROW:_MISC_ROW + HID_PAD, 1:2].astype(f32)     # (128, 1)
    b1c = p_ref[_MISC_ROW:_MISC_ROW + HID_PAD, 2:3].astype(f32)      # (128, 1)
    b2c = p_ref[_MISC_ROW:_MISC_ROW + HID_PAD, 3:4].astype(f32)      # (128, 1)
    b3c = p_ref[_MISC_ROW:_MISC_ROW + OUT_PAD, 4:5].astype(f32)      # (8, 1)

    # ---- Layer 1 (in=2): VPU outer-product broadcasts (no >99%-padded MXU pass).
    # Rows >= 10 are exactly 0 (zero-padded weights/bias) and stay 0 through ReLU.
    h1 = jnp.maximum(w1c0 * x0 + w1c1 * x1 + b1c, 0.0)               # (128, tb)

    # ---- Layer 2 (10 -> 10) on the MXU, zero-padded to (128, 128).
    w2t = p_ref[_W2T_ROW:_W2T_ROW + HID_PAD, :].astype(f32)          # (128, 128)
    h2 = jnp.dot(w2t, h1, preferred_element_type=f32) + b2c
    h2 = jnp.maximum(h2, 0.0)                                        # (128, tb)

    # ---- Layer 3 (10 -> 5): (8,128) @ (128, tb) -> lane-dense (8, tb) store.
    w3t = p_ref[_W3T_ROW:_W3T_ROW + OUT_PAD, :].astype(f32)          # (8, 128)
    out = jnp.dot(w3t, h2, preferred_element_type=f32) + b3c         # (8, tb)
    o_ref[...] = out.astype(o_ref.dtype)


@functools.partial(jax.jit, static_argnames=("tile_b",))
def multi_class_model_forward_t(x_t, packed_params, *, tile_b=1024):
    """Core (performance) path.

    x_t: (2, B) activations, batch on the minor axis; packed_params: (264, 128).
    Returns the padded transposed logits (8, b_padded); rows 0:5 and lanes 0:B valid.
    """
    in_feat, B = x_t.shape
    dtype = x_t.dtype

    # Lane-aligned batch tiling; keep grid >= 2 when the batch allows it so both
    # v7x TensorCores get work (no-op on v5e/v6e single-core chips).
    tile_b = max(LANE, (int(tile_b) // LANE) * LANE)
    b_aligned = _round_up(B, LANE)
    tb = min(tile_b, b_aligned)
    if b_aligned >= 2 * LANE:
        tb = min(tb, max(LANE, (b_aligned // 2) // LANE * LANE))
    b_padded = _round_up(B, tb)
    if b_padded != B:
        x_t = jnp.pad(x_t, ((0, 0), (0, b_padded - B)))
    grid = (b_padded // tb,)

    itemsize = jnp.dtype(dtype).itemsize
    flops = int(b_padded) * 2 * (HID_PAD * HID_PAD + OUT_PAD * HID_PAD)
    # Physically padded HBM streams: x is sublane-padded 2 -> 8 rows, params are
    # DMA'd once (constant index_map), output is the (8, B) slab.
    bytes_accessed = (8 * b_padded * itemsize
                      + _PACK_ROWS * LANE * itemsize
                      + OUT_PAD * b_padded * itemsize)

    return pl.pallas_call(
        mlp_kernel,
        out_shape=jax.ShapeDtypeStruct((OUT_PAD, b_padded), dtype),
        grid=grid,
        in_specs=[
            # Batch-tiled activations, batch on lanes.
            pl.BlockSpec((in_feat, tb), lambda i: (0, i)),
            # Packed parameters: constant block index -> DMA'd once, VMEM-resident
            # across all grid steps (~135 KB; double-buffer overhead accepted).
            pl.BlockSpec((_PACK_ROWS, LANE), lambda i: (0, 0)),
        ],
        out_specs=pl.BlockSpec((OUT_PAD, tb), lambda i: (0, i)),
        compiler_params=pltpu.CompilerParams(
            dimension_semantics=("parallel",)),
        cost_estimate=pl.CostEstimate(
            flops=flops, transcendentals=0, bytes_accessed=bytes_accessed),
    )(x_t, packed_params)


def multi_class_model_forward(x, packed_params, *, tile_b=1024):
    """PyTorch-layout convenience wrapper: x (B, 2) -> logits (B, 5) f32.

    The transposes/slice here touch only ~32 B/sample; producers/consumers that
    care should use multi_class_model_forward_t with (2, B) / (8, B) directly.
    """
    B = x.shape[0]
    x_t = x.T.astype(packed_params.dtype)
    out_t = multi_class_model_forward_t(x_t, packed_params, tile_b=tile_b)
    return out_t[:5, :B].T.astype(jnp.float32)


def init_params(key):
    # Mimics PyTorch nn.Linear defaults: W, b ~ U(-1/sqrt(fan_in), 1/sqrt(fan_in)).
    # Weights stored as (fan_in, fan_out) so y = x @ W + b == x @ W_pt.T + b_pt.
    def linear(key, fan_in, fan_out):
        kw, kb = jax.random.split(key)
        bound = 1.0 / jnp.sqrt(jnp.float32(fan_in))
        w = jax.random.uniform(kw, (fan_in, fan_out), jnp.float32, -bound, bound)
        b = jax.random.uniform(kb, (fan_out,), jnp.float32, -bound, bound)
        return w, b

    k1, k2, k3 = jax.random.split(key, 3)
    w1, b1 = linear(k1, 2, 10)
    w2, b2 = linear(k2, 10, 10)
    w3, b3 = linear(k3, 10, 5)
    return (w1, b1, w2, b2, w3, b3)


def pack_params(params, dtype=jnp.float32):
    """Pack all six parameters into one zero-padded (264, 128) buffer.

    CORRECTNESS INVARIANT: every entry outside the valid weight/bias regions must
    be exactly 0 so that padded hidden rows stay exactly 0 through the ReLUs and
    the padded MXU contractions.  `dtype=jnp.bfloat16` halves the x/out/param HBM
    streams on v6e/v7x; in-kernel accumulation stays f32 either way.
    """
    w1, b1, w2, b2, w3, b3 = params
    assert w1.shape == (2, 10) and w2.shape == (10, 10) and w3.shape == (10, 5)
    p = jnp.zeros((_PACK_ROWS, LANE), jnp.float32)
    p = p.at[_MISC_ROW:_MISC_ROW + 10, 0].set(w1[0, :])   # W1^T column 0
    p = p.at[_MISC_ROW:_MISC_ROW + 10, 1].set(w1[1, :])   # W1^T column 1
    p = p.at[_MISC_ROW:_MISC_ROW + 10, 2].set(b1)
    p = p.at[_MISC_ROW:_MISC_ROW + 10, 3].set(b2)
    p = p.at[_MISC_ROW:_MISC_ROW + 5, 4].set(b3)
    p = p.at[_W2T_ROW:_W2T_ROW + 10, 0:10].set(w2.T)      # h2 = W2^T @ h1
    p = p.at[_W3T_ROW:_W3T_ROW + 5, 0:10].set(w3.T)       # out = W3^T @ h2
    return p.astype(dtype)


def reference_forward(x, params):
    w1, b1, w2, b2, w3, b3 = params
    h1 = jnp.maximum(x @ w1 + b1, 0.0)
    h2 = jnp.maximum(h1 @ w2 + b2, 0.0)
    return h2 @ w3 + b3


if __name__ == "__main__":
    key = jax.random.PRNGKey(0)
    k_params, k_x = jax.random.split(key)
    params = init_params(k_params)
    packed = pack_params(params)

    # Main check: batch of 256 -> two 128-lane tiles (exercises grid=(2,)).
    batch = 256
    x = jax.random.normal(k_x, (batch, 2), jnp.float32)

    out = jax.block_until_ready(multi_class_model_forward(x, packed))
    ref = reference_forward(x, params)
    assert out.shape == (batch, 5)
    assert jnp.allclose(out, ref, atol=1e-5, rtol=1e-5), float(
        jnp.max(jnp.abs(out - ref)))

    # Tiny, non-tile-sized batch -> padding / slicing path (grid=(1,)).
    x_small = jax.random.normal(jax.random.PRNGKey(1), (8, 2), jnp.float32)
    out_small = jax.block_until_ready(multi_class_model_forward(x_small, packed))
    ref_small = reference_forward(x_small, params)
    assert out_small.shape == (8, 5)
    assert jnp.allclose(out_small, ref_small, atol=1e-5, rtol=1e-5)

    # bf16 boundary-cast path (v6e/v7x recommendation): halves the HBM streams;
    # in-kernel accumulation remains f32, so only boundary rounding error remains.
    packed_bf16 = pack_params(params, dtype=jnp.bfloat16)
    out_bf16 = jax.block_until_ready(multi_class_model_forward(x, packed_bf16))
    assert out_bf16.shape == (batch, 5)
    assert jnp.allclose(out_bf16, ref, atol=1e-1, rtol=1e-1)

    print("KERNEL_OK")
</pallas_src>

<mosaic_0001>
module attributes {stable_mosaic.version = 11 : i64} {
  func.func @mlp_kernel(%arg0: i32, %arg1: memref<2x128xf32, #tpu.memory_space<vmem>>, %arg2: memref<264x128xf32, #tpu.memory_space<vmem>>, %arg3: memref<8x128xf32, #tpu.memory_space<vmem>>) attributes {dimension_semantics = [#tpu.dimension_semantics<parallel>], iteration_bounds = array<i64: 2>, scalar_prefetch = 0 : i64, scratch_operands = 0 : i64, tpu.core_type = #tpu.core_type<tc>, window_params = [{transform_indices = @transform_0, window_bounds = array<i64: 2, 128>}, {pipeline_mode = #tpu.pipeline_mode<synchronous>, transform_indices = @transform_1, window_bounds = array<i64: 264, 128>}, {transform_indices = @transform_2, window_bounds = array<i64: 8, 128>}]} {
    %c0 = arith.constant 0 : index
    %c0_0 = arith.constant 0 : index
    %0 = vector.load %arg1[%c0, %c0_0] : memref<2x128xf32, #tpu.memory_space<vmem>>, vector<1x128xf32>
    %c1 = arith.constant 1 : index
    %c0_1 = arith.constant 0 : index
    %1 = vector.load %arg1[%c1, %c0_1] : memref<2x128xf32, #tpu.memory_space<vmem>>, vector<1x128xf32>
    %c0_2 = arith.constant 0 : index
    %c0_3 = arith.constant 0 : index
    %2 = vector.load %arg2[%c0_2, %c0_3] : memref<264x128xf32, #tpu.memory_space<vmem>>, vector<128x1xf32>
    %c0_4 = arith.constant 0 : index
    %c1_5 = arith.constant 1 : index
    %3 = vector.load %arg2[%c0_4, %c1_5] : memref<264x128xf32, #tpu.memory_space<vmem>>, vector<128x1xf32>
    %c0_6 = arith.constant 0 : index
    %c2 = arith.constant 2 : index
    %4 = vector.load %arg2[%c0_6, %c2] : memref<264x128xf32, #tpu.memory_space<vmem>>, vector<128x1xf32>
    %c0_7 = arith.constant 0 : index
    %c3 = arith.constant 3 : index
    %5 = vector.load %arg2[%c0_7, %c3] : memref<264x128xf32, #tpu.memory_space<vmem>>, vector<128x1xf32>
    %c0_8 = arith.constant 0 : index
    %c4 = arith.constant 4 : index
    %6 = vector.load %arg2[%c0_8, %c4] : memref<264x128xf32, #tpu.memory_space<vmem>>, vector<8x1xf32>
    %7 = vector.broadcast %2 : vector<128x1xf32> to vector<128x128xf32>
    %8 = vector.broadcast %0 : vector<1x128xf32> to vector<128x128xf32>
    %9 = arith.mulf %7, %8 : vector<128x128xf32>
    %10 = vector.broadcast %3 : vector<128x1xf32> to vector<128x128xf32>
    %11 = vector.broadcast %1 : vector<1x128xf32> to vector<128x128xf32>
    %12 = arith.mulf %10, %11 : vector<128x128xf32>
    %13 = arith.addf %9, %12 : vector<128x128xf32>
    %14 = vector.broadcast %4 : vector<128x1xf32> to vector<128x128xf32>
    %15 = arith.addf %13, %14 : vector<128x128xf32>
    %cst = arith.constant 0.000000e+00 : f32
    %16 = vector.broadcast %cst : f32 to vector<128x128xf32>
    %17 = arith.maximumf %15, %16 : vector<128x128xf32>
    %c128 = arith.constant 128 : index
    %c0_9 = arith.constant 0 : index
    %18 = vector.load %arg2[%c128, %c0_9] : memref<264x128xf32, #tpu.memory_space<vmem>>, vector<128x128xf32>
    %cst_10 = arith.constant dense<0.000000e+00> : vector<128x128xf32>
    %19 = tpu.matmul %18, %17, %cst_10 {dimension_numbers = #tpu.dot_dimension_numbers<[1], [0], [0], [1], [0, 0, 1, 1], [], []>} : vector<128x128xf32>, vector<128x128xf32>, vector<128x128xf32> -> vector<128x128xf32>
    %20 = vector.broadcast %5 : vector<128x1xf32> to vector<128x128xf32>
    %21 = arith.addf %19, %20 : vector<128x128xf32>
    %cst_11 = arith.constant 0.000000e+00 : f32
    %22 = vector.broadcast %cst_11 : f32 to vector<128x128xf32>
    %23 = arith.maximumf %21, %22 : vector<128x128xf32>
    %c256 = arith.constant 256 : index
    %c0_12 = arith.constant 0 : index
    %24 = vector.load %arg2[%c256, %c0_12] : memref<264x128xf32, #tpu.memory_space<vmem>>, vector<8x128xf32>
    %cst_13 = arith.constant dense<0.000000e+00> : vector<8x128xf32>
    %25 = tpu.matmul %24, %23, %cst_13 {dimension_numbers = #tpu.dot_dimension_numbers<[1], [0], [0], [1], [0, 0, 1, 1], [], []>} : vector<8x128xf32>, vector<128x128xf32>, vector<8x128xf32> -> vector<8x128xf32>
    %26 = vector.broadcast %6 : vector<8x1xf32> to vector<8x128xf32>
    %27 = arith.addf %25, %26 : vector<8x128xf32>
    %c0_14 = arith.constant 0 : index
    %c0_15 = arith.constant 0 : index
    %28 = vector.load %arg3[%c0_14, %c0_15] : memref<8x128xf32, #tpu.memory_space<vmem>>, vector<8x128xf32>
    tpu.vector_store %arg3[%c0_14, %c0_15], %27 {strides = array<i32>} : memref<8x128xf32, #tpu.memory_space<vmem>>, vector<8x128xf32>,
    return
  }
  func.func @transform_0(%arg0: i32) -> (i32, i32) {
    %c0_i32 = arith.constant 0 : i32
    %c0_i32_0 = arith.constant 0 : i32
    return %c0_i32, %arg0 : i32, i32
  }
  func.func @transform_1(%arg0: i32) -> (i32, i32) {
    %c0_i32 = arith.constant 0 : i32
    %c0_i32_0 = arith.constant 0 : i32
    %c0_i32_1 = arith.constant 0 : i32
    return %c0_i32, %c0_i32_0 : i32, i32
  }
  func.func @transform_2(%arg0: i32) -> (i32, i32) {
    %c0_i32 = arith.constant 0 : i32
    %c0_i32_0 = arith.constant 0 : i32
    return %c0_i32, %arg0 : i32, i32
  }
}

</mosaic_0001>

<llo_original>
// kernel: multi_class_model_forward_t.1
$region0: #{multi_class_model_forward_t.1}
  #allocation0 [shape = 'u32[]', space=smem, size = 0x4, offset = 0x4, fixed_abs, tag = 'smem constant byte address 0x4 - core index']
  #allocation1 [shape = 'u32[144,128]{1,0:T(1,128)}', space=vmem, size = 0x12000, scoped, tag = 'internal scratch']
  %s0 = inlined_call_operand.hbm [shape: f32[2,256], index: 0, kind: input, shape index: {}]
  %s1 = inlined_call_operand.hbm [shape: f32[264,128], index: 1, kind: input, shape index: {}]
  %s2 = inlined_call_operand.hbm [shape: f32[8,256], index: 2, kind: output, shape index: {}]
  %s3 = sld [smem:[#allocation0]]
  $region49: #{multi_class_model_forward_t.1} parent=0
    _
  %s5 = ssub.s32 1, %s3
  %s6 = scalar_select 0, %s5, %s3
  $region1: #{multi_class_model_forward_t.1} parent=0
    #allocation2 [shape = 'u8[2048]{0}', space=vmem, size = 0x800, scoped, tag = 'input window, operand 0']
    #allocation3 [shape = 's32[2]{0}', space=sflag, size = 0x8, scoped, tag = 'scoped memory for multi_class_model_forward_t.1']
    #allocation4 [shape = 's32[2]{0}', space=sflag, size = 0x8, scoped, tag = 'scoped memory for multi_class_model_forward_t.1']
    #allocation5 [shape = 'u8[135168]{0}', space=vmem, size = 0x21000, scoped, tag = 'input window, operand 1, single buffered']
    #allocation6 [shape = 's32[1]{0}', space=sflag, size = 0x4, scoped, tag = 'scoped memory for multi_class_model_forward_t.1']
    #allocation7 [shape = 'u8[8192]{0}', space=vmem, size = 0x2000, scoped, tag = 'output window, operand 0']
    %7 = vsyncpa [#allocation3], 0
    %s8 = scalar_lea.sflag [#allocation3], 1
    %9 = vsyncpa %s8, 0
    %10 = vsyncpa [#allocation6], 0
    %11 = vsyncpa [#allocation4], 0
    %s12 = scalar_lea.sflag [#allocation4], 1
    %13 = vsyncpa %s12, 0
    loop: start=0, step=1, limit=4
    $region2: #{multi_class_model_forward_t.1} parent=1 // loop_pre_header
      _
    $region3: #{multi_class_model_forward_t.1} parent=1 // loop_header
      %s15 = sphi 0, %s19
      %p16 = scmp.ge.s32.totalorder %s15, 4
      %s25 = sphi 0, %s27
      %s28 = sphi 0, %s25
      %s29 = sphi 0, %s28
      %s45 = sphi 0, %s29
      %s49 = sphi 0, %s49
      %s51 = sphi 0, %s49
      %s52 = sphi 0, %s51
      %s66 = sphi 0, %s52
      %s72 = sphi 0, %s74
      %s75 = sphi 0, %s72
      %s76 = sphi 0, %s75
      %s92 = sphi 0, %s76
    $region4: #{multi_class_model_forward_t.1} parent=1 // loop_header_branch
      %18 = sbr.rel (%p16) target = $region8
    $region5: #{multi_class_model_forward_t.1} parent=1 // loop_body
      %s20 = ssub.s32 %s15, 1
      %s21 = ssub.s32 %s15, 2
      %s22 = sadd.s32 %s15, 1
      %s23 = ssub.s32 %s15, %s22
      %p24 = scmp.eq.s32.totalorder %s23, 0
      %s26 = sadd.s32 %s25, 1
      %s27 = scalar_select %p24, %s25, %s26
      %p30 = pneg %p24
      %p31 = scmp.eq.s32.totalorder %s15, 1
      %p32 = por %p30, %p31
      %p33 = scmp.ne.s32.totalorder %s25, %s28
      %p34 = scmp.eq.s32.totalorder %s15, 0
      %p35 = por %p33, %p34
      %p36 = scmp.ne.s32.totalorder %s25, %s28
      %p37 = scmp.eq.s32.totalorder %s20, 1
      %p38 = por %p36, %p37
      %p39 = scmp.ne.s32.totalorder %s28, %s29
      %p40 = scmp.eq.s32.totalorder %s20, 0
      %p41 = por %p39, %p40
      %p42 = scmp.ne.s32.totalorder %s28, %s29
      %p43 = scmp.eq.s32.totalorder %s21, 1
      %p44 = por %p42, %p43
      %p46 = scmp.ne.s32.totalorder %s29, %s45
      %p47 = scmp.eq.s32.totalorder %s21, 0
      %p48 = por %p46, %p47
      %s50 = sadd.s32 %s49, 1
      %p53 = scmp.eq.s32.totalorder %s15, 1
      %p54 = scmp.ne.s32.totalorder %s49, %s51
      %p55 = scmp.eq.s32.totalorder %s15, 0
      %p56 = por %p54, %p55
      %p57 = scmp.ne.s32.totalorder %s49, %s51
      %p58 = scmp.eq.s32.totalorder %s20, 1
      %p59 = por %p57, %p58
      %p60 = scmp.ne.s32.totalorder %s51, %s52
      %p61 = scmp.eq.s32.totalorder %s20, 0
      %p62 = por %p60, %p61
      %p63 = scmp.ne.s32.totalorder %s51, %s52
      %p64 = scmp.eq.s32.totalorder %s21, 1
      %p65 = por %p63, %p64
      %p67 = scmp.ne.s32.totalorder %s52, %s66
      %p68 = scmp.eq.s32.totalorder %s21, 0
      %p69 = por %p67, %p68
      %s70 = ssub.s32 %s15, %s22
      %p71 = scmp.eq.s32.totalorder %s70, 0
      %s73 = sadd.s32 %s72, 1
      %s74 = scalar_select %p71, %s72, %s73
      %p77 = pneg %p71
      %p78 = scmp.eq.s32.totalorder %s15, 1
      %p79 = por %p77, %p78
      %p80 = scmp.ne.s32.totalorder %s72, %s75
      %p81 = scmp.eq.s32.totalorder %s15, 0
      %p82 = por %p80, %p81
      %p83 = scmp.ne.s32.totalorder %s72, %s75
      %p84 = scmp.eq.s32.totalorder %s20, 1
      %p85 = por %p83, %p84
      %p86 = scmp.ne.s32.totalorder %s75, %s76
      %p87 = scmp.eq.s32.totalorder %s20, 0
      %p88 = por %p86, %p87
      %p89 = scmp.ne.s32.totalorder %s75, %s76
      %p90 = scmp.eq.s32.totalorder %s21, 1
      %p91 = por %p89, %p90
      %p93 = scmp.ne.s32.totalorder %s76, %s92
      %p94 = scmp.eq.s32.totalorder %s21, 0
      %p95 = por %p93, %p94
      %p96 = scmp.le.s32.totalorder 1, %s15
      %p97 = scmp.lt.s32.totalorder %s15, 3
      %p98 = pnand %p96, %p97
      %p99 = pneg %p98
      // Predicated region
      $region9: #{multi_class_model_forward_t.1} parent=5 // pred_check
        _
      $region10: #{multi_class_model_forward_t.1} parent=5 // pred_check_branch
        %101 = sbr.rel (%p98) target = $region12
      $region11: #{multi_class_model_forward_t.1} parent=5 // pred_region
        %s102 = ssub.s32 %s15, 1
        // Predicated region
        $region13: #{multi_class_model_forward_t.1} parent=11 // pred_check
          %p103 = pneg %p62
        $region14: #{multi_class_model_forward_t.1} parent=11 // pred_check_branch
          %105 = sbr.rel (%p103) target = $region16
        $region15: #{multi_class_model_forward_t.1} parent=11 // pred_region
          %s107 = ssub.s32 4224, 4224
          %108 = vsyncadd [#allocation6], %s107
          %s109 = sshll.u32 [#allocation5], 4
          %s110 = int_to_ptr.vmem [resolvable:$true] %s109
          %115 = dma.hbm_to_vmem [thread:$0]  %s1, 4224, %s110, [#allocation6], 128, 128, 8
        $region16: #{multi_class_model_forward_t.1} parent=11 // pred_fallthru
          _
      $region12: #{multi_class_model_forward_t.1} parent=5 // pred_fallthru
        _
      %p116 = scmp.lt.s32.totalorder %s15, 2
      // Predicated region
      $region17: #{multi_class_model_forward_t.1} parent=5 // pred_check
        %p117 = pneg %p116
      $region18: #{multi_class_model_forward_t.1} parent=5 // pred_check_branch
        %119 = sbr.rel (%p117) target = $region20
      $region19: #{multi_class_model_forward_t.1} parent=5 // pred_region
        // Predicated region
        $region21: #{multi_class_model_forward_t.1} parent=19 // pred_check
          %p120 = pneg %p35
        $region22: #{multi_class_model_forward_t.1} parent=19 // pred_check_branch
          %122 = sbr.rel (%p120) target = $region24
        $region23: #{multi_class_model_forward_t.1} parent=19 // pred_region
          %s123 = sand.u32 %s25, 1
          %s124 = scalar_lea.sflag [#allocation3], %s123
          %s125 = sand.u32 %s25, 1
          %s126 = smul.addr %s125, 2
          %s127 = scalar_lea.vmem [#allocation2], %s126
          %s129 = ssub.s32 32, 32
          %130 = vsyncadd %s124, %s129
          %s131 = smul.addr %s15, 32
          %s132 = scalar_lea.hbm %s0, %s131
          %s134 = sshll.u32 %s127, 4
          %s135 = int_to_ptr.vmem [resolvable:$true] %s134
          %137 = dma.hbm_to_vmem [thread:$0]  %s132, 32, %s135, %s124
        $region24: #{multi_class_model_forward_t.1} parent=19 // pred_fallthru
          _
      $region20: #{multi_class_model_forward_t.1} parent=5 // pred_fallthru
        _
      %p138 = scmp.le.s32.totalorder 1, %s15
      %p139 = scmp.lt.s32.totalorder %s15, 3
      %p140 = pnand %p138, %p139
      %p141 = pneg %p140
      // Predicated region
      $region25: #{multi_class_model_forward_t.1} parent=5 // pred_check
        _
      $region26: #{multi_class_model_forward_t.1} parent=5 // pred_check_branch
        %143 = sbr.rel (%p140) target = $region28
      $region27: #{multi_class_model_forward_t.1} parent=5 // pred_region
        %s144 = ssub.s32 %s15, 1
        %s145 = sand.u32 %s28, 1
        %s146 = scalar_lea.sflag [#allocation3], %s145
        %s147 = sand.u32 %s28, 1
        %s148 = smul.addr %s147, 2
        %s149 = scalar_lea.vmem [#allocation2], %s148
        // Predicated region
        $region29: #{multi_class_model_forward_t.1} parent=27 // pred_check
          %p150 = pneg %p41
        $region30: #{multi_class_model_forward_t.1} parent=27 // pred_check_branch
          %152 = sbr.rel (%p150) target = $region32
        $region31: #{multi_class_model_forward_t.1} parent=27 // pred_region
          %153 = dma.done %s146, 32
        $region32: #{multi_class_model_forward_t.1} parent=27 // pred_fallthru
          _
        // Predicated region
        $region33: #{multi_class_model_forward_t.1} parent=27 // pred_check
          %p154 = pneg %p62
        $region34: #{multi_class_model_forward_t.1} parent=27 // pred_check_branch
          %156 = sbr.rel (%p154) target = $region36
        $region35: #{multi_class_model_forward_t.1} parent=27 // pred_region
          %157 = dma.done [#allocation6], 4224
        $region36: #{multi_class_model_forward_t.1} parent=27 // pred_fallthru
          _
        %s158 = sand.u32 %s28, 1
        %s159 = scalar_lea.sflag [#allocation3], %s158
        %s160 = sand.u32 %s28, 1
        %s161 = smul.addr %s160, 2
        %s162 = scalar_lea.vmem [#allocation2], %s161
        %p163 = pneg %p41
        %p164 = pneg %p38
        %p165 = pneg %p62
        %p166 = pneg %p59
        %p167 = pneg %p88
        %p168 = pneg %p85
        %s169 = sand.u32 %s75, 1
        %s170 = scalar_lea.sflag [#allocation4], %s169
        %s171 = sand.u32 %s75, 1
        %s172 = smul.addr %s171, 8
        %s173 = scalar_lea.vmem [#allocation7], %s172
        %v174 = vld [vmem:[%s149] sm:$0x1]
        %v175 = vld [vmem:[%s149 + $0x1] sm:$0x1]
        %v176 = vld [vmem:[#allocation5] sm:$0xff]
        %v177 = vld [vmem:[#allocation5 + $0x8] sm:$0xff]
        %v178 = vld [vmem:[#allocation5 + $0x10] sm:$0xff]
        %v179 = vld [vmem:[#allocation5 + $0x18] sm:$0xff]
        %v180 = vld [vmem:[#allocation5 + $0x20] sm:$0xff]
        %v181 = vld [vmem:[#allocation5 + $0x28] sm:$0xff]
        %v182 = vld [vmem:[#allocation5 + $0x30] sm:$0xff]
        %v183 = vld [vmem:[#allocation5 + $0x38] sm:$0xff]
        %v184 = vld [vmem:[#allocation5 + $0x40] sm:$0xff]
        %v185 = vld [vmem:[#allocation5 + $0x48] sm:$0xff]
        %v186 = vld [vmem:[#allocation5 + $0x50] sm:$0xff]
        %v187 = vld [vmem:[#allocation5 + $0x58] sm:$0xff]
        %v188 = vld [vmem:[#allocation5 + $0x60] sm:$0xff]
        %v189 = vld [vmem:[#allocation5 + $0x68] sm:$0xff]
        %v190 = vld [vmem:[#allocation5 + $0x70] sm:$0xff]
        %v191 = vld [vmem:[#allocation5 + $0x78] sm:$0xff]
        %193 = vset.pattern.permute.xlu0 0
        %194 = vperm.xlu0 %193, %v176
        %v195 = vpop.permute.xlu0 %194
        %198 = vset.pattern.permute.xlu0 0
        %199 = vperm.xlu0 %198, %v177
        %v200 = vpop.permute.xlu0 %199
        %203 = vset.pattern.permute.xlu0 0
        %204 = vperm.xlu0 %203, %v178
        %v205 = vpop.permute.xlu0 %204
        %208 = vset.pattern.permute.xlu0 0
        %209 = vperm.xlu0 %208, %v179
        %v210 = vpop.permute.xlu0 %209
        %213 = vset.pattern.permute.xlu0 0
        %214 = vperm.xlu0 %213, %v180
        %v215 = vpop.permute.xlu0 %214
        %218 = vset.pattern.permute.xlu0 0
        %219 = vperm.xlu0 %218, %v181
        %v220 = vpop.permute.xlu0 %219
        %223 = vset.pattern.permute.xlu0 0
        %224 = vperm.xlu0 %223, %v182
        %v225 = vpop.permute.xlu0 %224
        %228 = vset.pattern.permute.xlu0 0
        %229 = vperm.xlu0 %228, %v183
        %v230 = vpop.permute.xlu0 %229
        %233 = vset.pattern.permute.xlu0 0
        %234 = vperm.xlu0 %233, %v184
        %v235 = vpop.permute.xlu0 %234
        %238 = vset.pattern.permute.xlu0 0
        %239 = vperm.xlu0 %238, %v185
        %v240 = vpop.permute.xlu0 %239
        %243 = vset.pattern.permute.xlu0 0
        %244 = vperm.xlu0 %243, %v186
        %v245 = vpop.permute.xlu0 %244
        %248 = vset.pattern.permute.xlu0 0
        %249 = vperm.xlu0 %248, %v187
        %v250 = vpop.permute.xlu0 %249
        %253 = vset.pattern.permute.xlu0 0
        %254 = vperm.xlu0 %253, %v188
        %v255 = vpop.permute.xlu0 %254
        %258 = vset.pattern.permute.xlu0 0
        %259 = vperm.xlu0 %258, %v189
        %v260 = vpop.permute.xlu0 %259
        %263 = vset.pattern.permute.xlu0 0
        %264 = vperm.xlu0 %263, %v190
        %v265 = vpop.permute.xlu0 %264
        %268 = vset.pattern.permute.xlu0 0
        %269 = vperm.xlu0 %268, %v191
        %v270 = vpop.permute.xlu0 %269
        %v272 = vlaneseq
        %v273 = vshrl.u32 %v272, 7
        %v274 = vsub.s32 0, %v273
        %v275 = vrot.slane %v174, %v274
        %v276 = vmul.f32 %v195, %v275
        %v277 = vmul.f32 %v200, %v275
        %v278 = vmul.f32 %v205, %v275
        %v279 = vmul.f32 %v210, %v275
        %v280 = vmul.f32 %v215, %v275
        %v281 = vmul.f32 %v220, %v275
        %v282 = vmul.f32 %v225, %v275
        %v283 = vmul.f32 %v230, %v275
        %v284 = vmul.f32 %v235, %v275
        %v285 = vmul.f32 %v240, %v275
        %v286 = vmul.f32 %v245, %v275
        %v287 = vmul.f32 %v250, %v275
        %v288 = vmul.f32 %v255, %v275
        %v289 = vmul.f32 %v260, %v275
        %v290 = vmul.f32 %v265, %v275
        %v291 = vmul.f32 %v270, %v275
        %292 = vset.pattern.permute.xlu0 1
        %293 = vperm.xlu0 %292, %v176
        %v294 = vpop.permute.xlu0 %293
        %296 = vset.pattern.permute.xlu0 1
        %297 = vperm.xlu0 %296, %v177
        %v298 = vpop.permute.xlu0 %297
        %300 = vset.pattern.permute.xlu0 1
        %301 = vperm.xlu0 %300, %v178
        %v302 = vpop.permute.xlu0 %301
        %304 = vset.pattern.permute.xlu0 1
        %305 = vperm.xlu0 %304, %v179
        %v306 = vpop.permute.xlu0 %305
        %308 = vset.pattern.permute.xlu0 1
        %309 = vperm.xlu0 %308, %v180
        %v310 = vpop.permute.xlu0 %309
        %312 = vset.pattern.permute.xlu0 1
        %313 = vperm.xlu0 %312, %v181
        %v314 = vpop.permute.xlu0 %313
        %316 = vset.pattern.permute.xlu0 1
        %317 = vperm.xlu0 %316, %v182
        %v318 = vpop.permute.xlu0 %317
        %320 = vset.pattern.permute.xlu0 1
        %321 = vperm.xlu0 %320, %v183
        %v322 = vpop.permute.xlu0 %321
        %324 = vset.pattern.permute.xlu0 1
        %325 = vperm.xlu0 %324, %v184
        %v326 = vpop.permute.xlu0 %325
        %328 = vset.pattern.permute.xlu0 1
        %329 = vperm.xlu0 %328, %v185
        %v330 = vpop.permute.xlu0 %329
        %332 = vset.pattern.permute.xlu0 1
        %333 = vperm.xlu0 %332, %v186
        %v334 = vpop.permute.xlu0 %333
        %336 = vset.pattern.permute.xlu0 1
        %337 = vperm.xlu0 %336, %v187
        %v338 = vpop.permute.xlu0 %337
        %340 = vset.pattern.permute.xlu0 1
        %341 = vperm.xlu0 %340, %v188
        %v342 = vpop.permute.xlu0 %341
        %344 = vset.pattern.permute.xlu0 1
        %345 = vperm.xlu0 %344, %v189
        %v346 = vpop.permute.xlu0 %345
        %348 = vset.pattern.permute.xlu0 1
        %349 = vperm.xlu0 %348, %v190
        %v350 = vpop.permute.xlu0 %349
        %352 = vset.pattern.permute.xlu0 1
        %353 = vperm.xlu0 %352, %v191
        %v354 = vpop.permute.xlu0 %353
        %v356 = vlaneseq
        %v357 = vshrl.u32 %v356, 7
        %v358 = vsub.s32 0, %v357
        %v359 = vrot.slane %v175, %v358
        %v360 = vmul.f32 %v294, %v359
        %v361 = vmul.f32 %v298, %v359
        %v362 = vmul.f32 %v302, %v359
        %v363 = vmul.f32 %v306, %v359
        %v364 = vmul.f32 %v310, %v359
        %v365 = vmul.f32 %v314, %v359
        %v366 = vmul.f32 %v318, %v359
        %v367 = vmul.f32 %v322, %v359
        %v368 = vmul.f32 %v326, %v359
        %v369 = vmul.f32 %v330, %v359
        %v370 = vmul.f32 %v334, %v359
        %v371 = vmul.f32 %v338, %v359
        %v372 = vmul.f32 %v342, %v359
        %v373 = vmul.f32 %v346, %v359
        %v374 = vmul.f32 %v350, %v359
        %v375 = vmul.f32 %v354, %v359
        %v376 = vadd.f32 %v276, %v360
        %v377 = vadd.f32 %v277, %v361
        %v378 = vadd.f32 %v278, %v362
        %v379 = vadd.f32 %v279, %v363
        %v380 = vadd.f32 %v280, %v364
        %v381 = vadd.f32 %v281, %v365
        %v382 = vadd.f32 %v282, %v366
        %v383 = vadd.f32 %v283, %v367
        %v384 = vadd.f32 %v284, %v368
        %v385 = vadd.f32 %v285, %v369
        %v386 = vadd.f32 %v286, %v370
        %v387 = vadd.f32 %v287, %v371
        %v388 = vadd.f32 %v288, %v372
        %v389 = vadd.f32 %v289, %v373
        %v390 = vadd.f32 %v290, %v374
        %v391 = vadd.f32 %v291, %v375
        %392 = vset.pattern.permute.xlu0 2
        %393 = vperm.xlu0 %392, %v176
        %v394 = vpop.permute.xlu0 %393
        %396 = vset.pattern.permute.xlu0 2
        %397 = vperm.xlu0 %396, %v177
        %v398 = vpop.permute.xlu0 %397
        %400 = vset.pattern.permute.xlu0 2
        %401 = vperm.xlu0 %400, %v178
        %v402 = vpop.permute.xlu0 %401
        %404 = vset.pattern.permute.xlu0 2
        %405 = vperm.xlu0 %404, %v179
        %v406 = vpop.permute.xlu0 %405
        %408 = vset.pattern.permute.xlu0 2
        %409 = vperm.xlu0 %408, %v180
        %v410 = vpop.permute.xlu0 %409
        %412 = vset.pattern.permute.xlu0 2
        %413 = vperm.xlu0 %412, %v181
        %v414 = vpop.permute.xlu0 %413
        %416 = vset.pattern.permute.xlu0 2
        %417 = vperm.xlu0 %416, %v182
        %v418 = vpop.permute.xlu0 %417
        %420 = vset.pattern.permute.xlu0 2
        %421 = vperm.xlu0 %420, %v183
        %v422 = vpop.permute.xlu0 %421
        %424 = vset.pattern.permute.xlu0 2
        %425 = vperm.xlu0 %424, %v184
        %v426 = vpop.permute.xlu0 %425
        %428 = vset.pattern.permute.xlu0 2
        %429 = vperm.xlu0 %428, %v185
        %v430 = vpop.permute.xlu0 %429
        %432 = vset.pattern.permute.xlu0 2
        %433 = vperm.xlu0 %432, %v186
        %v434 = vpop.permute.xlu0 %433
        %436 = vset.pattern.permute.xlu0 2
        %437 = vperm.xlu0 %436, %v187
        %v438 = vpop.permute.xlu0 %437
        %440 = vset.pattern.permute.xlu0 2
        %441 = vperm.xlu0 %440, %v188
        %v442 = vpop.permute.xlu0 %441
        %444 = vset.pattern.permute.xlu0 2
        %445 = vperm.xlu0 %444, %v189
        %v446 = vpop.permute.xlu0 %445
        %448 = vset.pattern.permute.xlu0 2
        %449 = vperm.xlu0 %448, %v190
        %v450 = vpop.permute.xlu0 %449
        %452 = vset.pattern.permute.xlu0 2
        %453 = vperm.xlu0 %452, %v191
        %v454 = vpop.permute.xlu0 %453
        %v456 = vadd.f32 %v376, %v394
        %v457 = vadd.f32 %v377, %v398
        %v458 = vadd.f32 %v378, %v402
        %v459 = vadd.f32 %v379, %v406
        %v460 = vadd.f32 %v380, %v410
        %v461 = vadd.f32 %v381, %v414
        %v462 = vadd.f32 %v382, %v418
        %v463 = vadd.f32 %v383, %v422
        %v464 = vadd.f32 %v384, %v426
        %v465 = vadd.f32 %v385, %v430
        %v466 = vadd.f32 %v386, %v434
        %v467 = vadd.f32 %v387, %v438
        %v468 = vadd.f32 %v388, %v442
        %v469 = vadd.f32 %v389, %v446
        %v470 = vadd.f32 %v390, %v450
        %v471 = vadd.f32 %v391, %v454
        %v472 = vmax.f32 %v456, 0.0
        %v473 = vmax.f32 %v457, 0.0
        %v474 = vmax.f32 %v458, 0.0
        %v475 = vmax.f32 %v459, 0.0
        %v476 = vmax.f32 %v460, 0.0
        %v477 = vmax.f32 %v461, 0.0
        %v478 = vmax.f32 %v462, 0.0
        %v479 = vmax.f32 %v463, 0.0
        %v480 = vmax.f32 %v464, 0.0
        %v481 = vmax.f32 %v465, 0.0
        %v482 = vmax.f32 %v466, 0.0
        %v483 = vmax.f32 %v467, 0.0
        %v484 = vmax.f32 %v468, 0.0
        %v485 = vmax.f32 %v469, 0.0
        %v486 = vmax.f32 %v470, 0.0
        %v487 = vmax.f32 %v471, 0.0
        %v488 = vld [vmem:[#allocation5 + $0x80] sm:$0xff]
        %v489 = vld [vmem:[#allocation5 + $0x88] sm:$0xff]
        %v490 = vld [vmem:[#allocation5 + $0x90] sm:$0xff]
        %v491 = vld [vmem:[#allocation5 + $0x98] sm:$0xff]
        %v492 = vld [vmem:[#allocation5 + $0xa0] sm:$0xff]
        %v493 = vld [vmem:[#allocation5 + $0xa8] sm:$0xff]
        %v494 = vld [vmem:[#allocation5 + $0xb0] sm:$0xff]
        %v495 = vld [vmem:[#allocation5 + $0xb8] sm:$0xff]
        %v496 = vld [vmem:[#allocation5 + $0xc0] sm:$0xff]
        %v497 = vld [vmem:[#allocation5 + $0xc8] sm:$0xff]
        %v498 = vld [vmem:[#allocation5 + $0xd0] sm:$0xff]
        %v499 = vld [vmem:[#allocation5 + $0xd8] sm:$0xff]
        %v500 = vld [vmem:[#allocation5 + $0xe0] sm:$0xff]
        %v501 = vld [vmem:[#allocation5 + $0xe8] sm:$0xff]
        %v502 = vld [vmem:[#allocation5 + $0xf0] sm:$0xff]
        %v503 = vld [vmem:[#allocation5 + $0xf8] sm:$0xff]
        %504 = vset.pattern.permute.xlu0 3
        %505 = vperm.xlu0 %504, %v176
        %v506 = vpop.permute.xlu0 %505
        %508 = vset.pattern.permute.xlu0 3
        %509 = vperm.xlu0 %508, %v177
        %v510 = vpop.permute.xlu0 %509
        %512 = vset.pattern.permute.xlu0 3
        %513 = vperm.xlu0 %512, %v178
        %v514 = vpop.permute.xlu0 %513
        %516 = vset.pattern.permute.xlu0 3
        %517 = vperm.xlu0 %516, %v179
        %v518 = vpop.permute.xlu0 %517
        %520 = vset.pattern.permute.xlu0 3
        %521 = vperm.xlu0 %520, %v180
        %v522 = vpop.permute.xlu0 %521
        %524 = vset.pattern.permute.xlu0 3
        %525 = vperm.xlu0 %524, %v181
        %v526 = vpop.permute.xlu0 %525
        %528 = vset.pattern.permute.xlu0 3
        %529 = vperm.xlu0 %528, %v182
        %v530 = vpop.permute.xlu0 %529
        %532 = vset.pattern.permute.xlu0 3
        %533 = vperm.xlu0 %532, %v183
        %v534 = vpop.permute.xlu0 %533
        %536 = vset.pattern.permute.xlu0 3
        %537 = vperm.xlu0 %536, %v184
        %v538 = vpop.permute.xlu0 %537
        %540 = vset.pattern.permute.xlu0 3
        %541 = vperm.xlu0 %540, %v185
        %v542 = vpop.permute.xlu0 %541
        %544 = vset.pattern.permute.xlu0 3
        %545 = vperm.xlu0 %544, %v186
        %v546 = vpop.permute.xlu0 %545
        %548 = vset.pattern.permute.xlu0 3
        %549 = vperm.xlu0 %548, %v187
        %v550 = vpop.permute.xlu0 %549
        %552 = vset.pattern.permute.xlu0 3
        %553 = vperm.xlu0 %552, %v188
        %v554 = vpop.permute.xlu0 %553
        %556 = vset.pattern.permute.xlu0 3
        %557 = vperm.xlu0 %556, %v189
        %v558 = vpop.permute.xlu0 %557
        %560 = vset.pattern.permute.xlu0 3
        %561 = vperm.xlu0 %560, %v190
        %v562 = vpop.permute.xlu0 %561
        %564 = vset.pattern.permute.xlu0 3
        %565 = vperm.xlu0 %564, %v191
        %v566 = vpop.permute.xlu0 %565
        %568 = vmatprep.subr.mxu0 0.0
        %569 = vmatpush1.msra.mxu0 %v472
        %570 = vmatprep.subr.mxu0 0.0
        %571 = vmatpush1.msra.mxu0 %v473
        %572 = vmatprep.subr.mxu0 0.0
        %573 = vmatpush1.msra.mxu0 %v474
        %574 = vmatprep.subr.mxu0 0.0
        %575 = vmatpush1.msra.mxu0 %v475
        %576 = vmatprep.subr.mxu0 0.0
        %577 = vmatpush1.msra.mxu0 %v476
        %578 = vmatprep.subr.mxu0 0.0
        %579 = vmatpush1.msra.mxu0 %v477
        %580 = vmatprep.subr.mxu0 0.0
        %581 = vmatpush1.msra.mxu0 %v478
        %582 = vmatprep.subr.mxu0 0.0
        %583 = vmatpush1.msra.mxu0 %v479
        %584 = vmatprep.subr.mxu0 0.0
        %585 = vmatpush1.msra.mxu0 %v480
        %586 = vmatprep.subr.mxu0 0.0
        %587 = vmatpush1.msra.mxu0 %v481
        %588 = vmatprep.subr.mxu0 0.0
        %589 = vmatpush1.msra.mxu0 %v482
        %590 = vmatprep.subr.mxu0 0.0
        %591 = vmatpush1.msra.mxu0 %v483
        %592 = vmatprep.subr.mxu0 0.0
        %593 = vmatpush1.msra.mxu0 %v484
        %594 = vmatprep.subr.mxu0 0.0
        %595 = vmatpush1.msra.mxu0 %v485
        %596 = vmatprep.subr.mxu0 0.0
        %597 = vmatpush1.msra.mxu0 %v486
        %598 = vmatprep.subr.mxu0 0.0
        %599 = vmatpush1.msra.mxu0 %v487
        %600 = vmatprep.subr.mxu0 0.0
        %601 = vmatpush1.msra.mxu0 0.0
        %602 = vmatprep.subr.mxu0 0.0
        %603 = vmatpush1.msra.mxu0 0.0
        %604 = vmatprep.subr.mxu0 0.0
        %605 = vmatpush1.msra.mxu0 0.0
        %606 = vmatprep.subr.mxu0 0.0
        %607 = vmatpush1.msra.mxu0 0.0
        %608 = vmatprep.subr.mxu0 0.0
        %609 = vmatpush1.msra.mxu0 0.0
        %610 = vmatprep.subr.mxu0 0.0
        %611 = vmatpush1.msra.mxu0 0.0
        %612 = vmatprep.subr.mxu0 0.0
        %613 = vmatpush1.msra.mxu0 0.0
        %614 = vmatprep.subr.mxu0 0.0
        %615 = vmatpush1.msra.mxu0 0.0
        %616 = vmatprep.subr.mxu0 0.0
        %617 = vmatpush1.msra.mxu0 0.0
        %618 = vmatprep.subr.mxu0 0.0
        %619 = vmatpush1.msra.mxu0 0.0
        %620 = vmatprep.subr.mxu0 0.0
        %621 = vmatpush1.msra.mxu0 0.0
        %622 = vmatprep.subr.mxu0 0.0
        %623 = vmatpush1.msra.mxu0 0.0
        %624 = vmatprep.subr.mxu0 0.0
        %625 = vmatpush1.msra.mxu0 0.0
        %626 = vmatprep.subr.mxu0 0.0
        %627 = vmatpush1.msra.mxu0 0.0
        %628 = vmatprep.subr.mxu0 0.0
        %629 = vmatpush1.msra.mxu0 0.0
        %630 = vmatprep.subr.mxu0 0.0
        %631 = vmatpush1.msra.mxu0 0.0
        %632 = vmatprep.mubr.f32.mxu0 0.0
        %633 = vmatmul.mubr.f32.gmra.mrb[0].mxu0 %v488
        %v634 = vpop.f32.mrb[0].mxu0
        %v635 = vadd.f32 %v506, %v634
        %v636 = vpop.f32.mrb[0].mxu0
        %637 = vmatprep.mubr.f32.mxu0 0.0
        %638 = vmatmul.mubr.f32.gmra.mrb[0].mxu0 %v489
        %v639 = vpop.f32.mrb[0].mxu0
        %v640 = vadd.f32 %v510, %v639
        %v641 = vpop.f32.mrb[0].mxu0
        %642 = vmatprep.mubr.f32.mxu0 0.0
        %643 = vmatmul.mubr.f32.gmra.mrb[0].mxu0 %v490
        %v644 = vpop.f32.mrb[0].mxu0
        %v645 = vadd.f32 %v514, %v644
        %v646 = vpop.f32.mrb[0].mxu0
        %647 = vmatprep.mubr.f32.mxu0 0.0
        %648 = vmatmul.mubr.f32.gmra.mrb[0].mxu0 %v491
        %v649 = vpop.f32.mrb[0].mxu0
        %v650 = vadd.f32 %v518, %v649
        %v651 = vpop.f32.mrb[0].mxu0
        %652 = vmatprep.mubr.f32.mxu0 0.0
        %653 = vmatmul.mubr.f32.gmra.mrb[0].mxu0 %v492
        %v654 = vpop.f32.mrb[0].mxu0
        %v655 = vadd.f32 %v522, %v654
        %v656 = vpop.f32.mrb[0].mxu0
        %657 = vmatprep.mubr.f32.mxu0 0.0
        %658 = vmatmul.mubr.f32.gmra.mrb[0].mxu0 %v493
        %v659 = vpop.f32.mrb[0].mxu0
        %v660 = vadd.f32 %v526, %v659
        %v661 = vpop.f32.mrb[0].mxu0
        %662 = vmatprep.mubr.f32.mxu0 0.0
        %663 = vmatmul.mubr.f32.gmra.mrb[0].mxu0 %v494
        %v664 = vpop.f32.mrb[0].mxu0
        %v665 = vadd.f32 %v530, %v664
        %v666 = vpop.f32.mrb[0].mxu0
        %667 = vmatprep.mubr.f32.mxu0 0.0
        %668 = vmatmul.mubr.f32.gmra.mrb[0].mxu0 %v495
        %v669 = vpop.f32.mrb[0].mxu0
        %v670 = vadd.f32 %v534, %v669
        %v671 = vpop.f32.mrb[0].mxu0
        %672 = vmatprep.mubr.f32.mxu0 0.0
        %673 = vmatmul.mubr.f32.gmra.mrb[0].mxu0 %v496
        %v674 = vpop.f32.mrb[0].mxu0
        %v675 = vadd.f32 %v538, %v674
        %v676 = vpop.f32.mrb[0].mxu0
        %677 = vmatprep.mubr.f32.mxu0 0.0
        %678 = vmatmul.mubr.f32.gmra.mrb[0].mxu0 %v497
        %v679 = vpop.f32.mrb[0].mxu0
        %v680 = vadd.f32 %v542, %v679
        %v681 = vpop.f32.mrb[0].mxu0
        %682 = vmatprep.mubr.f32.mxu0 0.0
        %683 = vmatmul.mubr.f32.gmra.mrb[0].mxu0 %v498
        %v684 = vpop.f32.mrb[0].mxu0
        %v685 = vadd.f32 %v546, %v684
        %v686 = vpop.f32.mrb[0].mxu0
        %687 = vmatprep.mubr.f32.mxu0 0.0
        %688 = vmatmul.mubr.f32.gmra.mrb[0].mxu0 %v499
        %v689 = vpop.f32.mrb[0].mxu0
        %v690 = vadd.f32 %v550, %v689
        %v691 = vpop.f32.mrb[0].mxu0
        %692 = vmatprep.mubr.f32.mxu0 0.0
        %693 = vmatmul.mubr.f32.gmra.mrb[0].mxu0 %v500
        %v694 = vpop.f32.mrb[0].mxu0
        %v695 = vadd.f32 %v554, %v694
        %v696 = vpop.f32.mrb[0].mxu0
        %697 = vmatprep.mubr.f32.mxu0 0.0
        %698 = vmatmul.mubr.f32.gmra.mrb[0].mxu0 %v501
        %v699 = vpop.f32.mrb[0].mxu0
        %v700 = vadd.f32 %v558, %v699
        %v701 = vpop.f32.mrb[0].mxu0
        %702 = vmatprep.mubr.f32.mxu0 0.0
        %703 = vmatmul.mubr.f32.gmra.mrb[0].mxu0 %v502
        %v704 = vpop.f32.mrb[0].mxu0
        %v705 = vadd.f32 %v562, %v704
        %v706 = vpop.f32.mrb[0].mxu0
        %707 = vmatprep.mubr.f32.mxu0 0.0
        %708 = vmatmul.mubr.f32.gmra.mrb[0].mxu0 %v503
        %v709 = vpop.f32.mrb[0].mxu0
        %v710 = vadd.f32 %v566, %v709
        %v711 = vpop.f32.mrb[0].mxu0
        %712 = vdwg.mxu0
        %v713 = vmax.f32 %v635, 0.0
        %v714 = vmax.f32 %v640, 0.0
        %v715 = vmax.f32 %v645, 0.0
        %v716 = vmax.f32 %v650, 0.0
        %v717 = vmax.f32 %v655, 0.0
        %v718 = vmax.f32 %v660, 0.0
        %v719 = vmax.f32 %v665, 0.0
        %v720 = vmax.f32 %v670, 0.0
        %v721 = vmax.f32 %v675, 0.0
        %v722 = vmax.f32 %v680, 0.0
        %v723 = vmax.f32 %v685, 0.0
        %v724 = vmax.f32 %v690, 0.0
        %v725 = vmax.f32 %v695, 0.0
        %v726 = vmax.f32 %v700, 0.0
        %v727 = vmax.f32 %v705, 0.0
        %v728 = vmax.f32 %v710, 0.0
        %v729 = vld [vmem:[#allocation5 + $0x100] sm:$0xff]
        %730 = vset.pattern.permute.xlu0 4
        %731 = vperm.xlu0 %730, %v176
        %v732 = vpop.permute.xlu0 %731
        %734 = vmatprep.subr.mxu0 0.0
        %735 = vmatpush1.msra.mxu0 %v713
        %736 = vmatprep.subr.mxu0 0.0
        %737 = vmatpush1.msra.mxu0 %v714
        %738 = vmatprep.subr.mxu0 0.0
        %739 = vmatpush1.msra.mxu0 %v715
        %740 = vmatprep.subr.mxu0 0.0
        %741 = vmatpush1.msra.mxu0 %v716
        %742 = vmatprep.subr.mxu0 0.0
        %743 = vmatpush1.msra.mxu0 %v717
        %744 = vmatprep.subr.mxu0 0.0
        %745 = vmatpush1.msra.mxu0 %v718
        %746 = vmatprep.subr.mxu0 0.0
        %747 = vmatpush1.msra.mxu0 %v719
        %748 = vmatprep.subr.mxu0 0.0
        %749 = vmatpush1.msra.mxu0 %v720
        %750 = vmatprep.subr.mxu0 0.0
        %751 = vmatpush1.msra.mxu0 %v721
        %752 = vmatprep.subr.mxu0 0.0
        %753 = vmatpush1.msra.mxu0 %v722
        %754 = vmatprep.subr.mxu0 0.0
        %755 = vmatpush1.msra.mxu0 %v723
        %756 = vmatprep.subr.mxu0 0.0
        %757 = vmatpush1.msra.mxu0 %v724
        %758 = vmatprep.subr.mxu0 0.0
        %759 = vmatpush1.msra.mxu0 %v725
        %760 = vmatprep.subr.mxu0 0.0
        %761 = vmatpush1.msra.mxu0 %v726
        %762 = vmatprep.subr.mxu0 0.0
        %763 = vmatpush1.msra.mxu0 %v727
        %764 = vmatprep.subr.mxu0 0.0
        %765 = vmatpush1.msra.mxu0 %v728
        %766 = vmatprep.subr.mxu0 0.0
        %767 = vmatpush1.msra.mxu0 0.0
        %768 = vmatprep.subr.mxu0 0.0
        %769 = vmatpush1.msra.mxu0 0.0
        %770 = vmatprep.subr.mxu0 0.0
        %771 = vmatpush1.msra.mxu0 0.0
        %772 = vmatprep.subr.mxu0 0.0
        %773 = vmatpush1.msra.mxu0 0.0
        %774 = vmatprep.subr.mxu0 0.0
        %775 = vmatpush1.msra.mxu0 0.0
        %776 = vmatprep.subr.mxu0 0.0
        %777 = vmatpush1.msra.mxu0 0.0
        %778 = vmatprep.subr.mxu0 0.0
        %779 = vmatpush1.msra.mxu0 0.0
        %780 = vmatprep.subr.mxu0 0.0
        %781 = vmatpush1.msra.mxu0 0.0
        %782 = vmatprep.subr.mxu0 0.0
        %783 = vmatpush1.msra.mxu0 0.0
        %784 = vmatprep.subr.mxu0 0.0
        %785 = vmatpush1.msra.mxu0 0.0
        %786 = vmatprep.subr.mxu0 0.0
        %787 = vmatpush1.msra.mxu0 0.0
        %788 = vmatprep.subr.mxu0 0.0
        %789 = vmatpush1.msra.mxu0 0.0
        %790 = vmatprep.subr.mxu0 0.0
        %791 = vmatpush1.msra.mxu0 0.0
        %792 = vmatprep.subr.mxu0 0.0
        %793 = vmatpush1.msra.mxu0 0.0
        %794 = vmatprep.subr.mxu0 0.0
        %795 = vmatpush1.msra.mxu0 0.0
        %796 = vmatprep.subr.mxu0 0.0
        %797 = vmatpush1.msra.mxu0 0.0
        %798 = vmatprep.mubr.f32.mxu0 0.0
        %799 = vmatmul.mubr.f32.gmra.mrb[0].mxu0 %v729
        %v800 = vpop.f32.mrb[0].mxu0
        %v801 = vadd.f32 %v732, %v800
        %v802 = vpop.f32.mrb[0].mxu0
        %803 = vdwg.mxu0
        %804 = vst [vmem:[%s173] sm:$0xff] %v801
        %s805 = sand.u32 %s75, 1
        %s806 = scalar_lea.sflag [#allocation4], %s805
        %s807 = sand.u32 %s75, 1
        %s808 = smul.addr %s807, 8
        %s809 = scalar_lea.vmem [#allocation7], %s808
        // Predicated region
        $region37: #{multi_class_model_forward_t.1} parent=27 // pred_check
          %p810 = pneg %p85
        $region38: #{multi_class_model_forward_t.1} parent=27 // pred_check_branch
          %812 = sbr.rel (%p810) target = $region40
        $region39: #{multi_class_model_forward_t.1} parent=27 // pred_region
          %s814 = ssub.s32 128, 128
          %815 = vsyncadd %s806, %s814
          %s816 = smul.addr %s20, 128
          %s817 = scalar_lea.hbm %s2, %s816
          %s819 = sshll.u32 %s809, 4
          %s820 = int_to_ptr.vmem [resolvable:$true] %s819
          %822 = dma.vmem_to_hbm [thread:$0]  %s820, 128, %s817, %s806
        $region40: #{multi_class_model_forward_t.1} parent=27 // pred_fallthru
          _
      $region28: #{multi_class_model_forward_t.1} parent=5 // pred_fallthru
        _
      %p823 = scmp.le.s32.totalorder 2, %s15
      // Predicated region
      $region41: #{multi_class_model_forward_t.1} parent=5 // pred_check
        %p824 = pneg %p823
      $region42: #{multi_class_model_forward_t.1} parent=5 // pred_check_branch
        %826 = sbr.rel (%p824) target = $region44
      $region43: #{multi_class_model_forward_t.1} parent=5 // pred_region
        %s827 = ssub.s32 %s15, 2
        // Predicated region
        $region45: #{multi_class_model_forward_t.1} parent=43 // pred_check
          %p828 = pneg %p91
        $region46: #{multi_class_model_forward_t.1} parent=43 // pred_check_branch
          %830 = sbr.rel (%p828) target = $region48
        $region47: #{multi_class_model_forward_t.1} parent=43 // pred_region
          %s831 = sand.u32 %s76, 1
          %s832 = scalar_lea.sflag [#allocation4], %s831
          %s833 = sand.u32 %s76, 1
          %s834 = smul.addr %s833, 8
          %s835 = scalar_lea.vmem [#allocation7], %s834
          %836 = dma.done %s832, 128
        $region48: #{multi_class_model_forward_t.1} parent=43 // pred_fallthru
          _
      $region44: #{multi_class_model_forward_t.1} parent=5 // pred_fallthru
        _
    $region6: #{multi_class_model_forward_t.1} parent=1 // loop_footer
      %s19 = sadd.s32 1, %s15
    $region7: #{multi_class_model_forward_t.1} parent=1 // loop_footer_branch
      %14 = sbr.rel target = $region3
    $region8: #{multi_class_model_forward_t.1} parent=1 // loop_exit
      _
    %837 = vsyncpa [#allocation3], 1
    %s838 = scalar_lea.sflag [#allocation3], 1
    %839 = vsyncpa %s838, 1
    %840 = vsyncpa [#allocation6], 1
    %841 = vsyncpa [#allocation4], 1
    %s842 = scalar_lea.sflag [#allocation4], 1
    %843 = vsyncpa %s842, 1

</llo_original>
